<compile_context>
chip_gen: v6e
topology: v6e:2x2x1
jax: 0.10.0
libtpu: 0.0.40
codegen_flags: <defaults>
</compile_context>

<pallas_src>
import functools

import jax
import jax.numpy as jnp
from jax.experimental import pallas as pl
from jax.experimental.pallas import tpu as pltpu


# ---------------------------------------------------------------------------
# Pallas kernel: direct conv (single stacked-K dot) + fused shift + ReLU
# ---------------------------------------------------------------------------
def _conv_bn_act_kernel(x_ref, w_ref, shift_ref, o_ref, *,
                        taps, w_pad, m, stride, has_act, nb):
    # x_ref:     (Nb, 1, Cin_g, L)            bf16  flattened padded image rows
    # w_ref:     (1, Cout_g, KH*KW*Cin_g)     bf16  (BN scale folded in)
    # shift_ref: (1, Cout_g, 1)               f32
    # o_ref:     (Nb, 1, Cout_g, M)           f32,  M = OH * W_pad
    w_mat = w_ref[0]                                   # (Cout_g, K)
    shift = shift_ref[0]                               # (Cout_g, 1)
    for b in range(nb):                                # static unroll, Nb small
        if stride == 1:
            slabs = [x_ref[b, 0, :, i * w_pad + j:i * w_pad + j + m]
                     for (i, j) in taps]               # each (Cin_g, M) bf16
        else:
            # TODO(synk): stride>1 path (lane-strided loads) is implemented but
            # not exercised by the self-test below.
            slabs = [x_ref[b, 0, :, pl.ds(i * w_pad + j, m, stride=stride)]
                     for (i, j) in taps]
        rhs = jnp.concatenate(slabs, axis=0)           # (K, M) bf16
        y = jnp.dot(w_mat, rhs,
                    preferred_element_type=jnp.float32) + shift   # f32 epilogue
        if has_act:
            y = jnp.maximum(y, 0.0)
        o_ref[b, 0] = y.astype(o_ref.dtype)


# ---------------------------------------------------------------------------
# Batch-tile picker: largest Nb dividing N that fits the VMEM budget while
# keeping >=2 grid steps (dual-TC / megacore occupancy) whenever possible.
# ---------------------------------------------------------------------------
def _pick_batch_tile(n, groups, in_img_bytes, out_img_bytes, w_bytes, budget):
    nb = 1
    for cand in range(1, n + 1):
        if n % cand:
            continue
        per_step = 2 * (cand * (in_img_bytes + out_img_bytes) + w_bytes)
        if per_step > budget:
            continue
        if groups * n >= 2 and groups * (n // cand) < 2:
            continue                       # would leave a v7x TensorCore idle
        nb = cand
    return nb


# ---------------------------------------------------------------------------
# ConvBnActBlock forward (NCHW in / NCHW out, like the PyTorch module)
# ---------------------------------------------------------------------------
def conv_bn_act_block(x, params, *, stride, padding, groups=1,
                      has_bn=True, has_act=True, eps=1e-5, keep_halo=False):
    """x: (N, Cin, H, W) float32 -> (N, Cout, OH, OW) float32."""
    weight = params["weight"]                     # (Cout, Cin_g, KH, KW)
    cout, cin_g, kh, kw = weight.shape
    n, cin, h, w = x.shape
    assert cin == cin_g * groups and cout % groups == 0
    cout_g = cout // groups

    oh = (h + 2 * padding - kh) // stride + 1
    ow = (w + 2 * padding - kw) // stride + 1
    w_pad = w + 2 * padding
    h_pad = h + 2 * padding
    m = oh * w_pad                                # flat output length / image
    k_dim = kh * kw * cin_g                       # stacked contraction dim

    # Fold BN (eval semantics) into a per-channel affine; fold the scale into
    # the weights so the kernel epilogue is just "+ shift" (+ ReLU).
    if has_bn:
        scale = params["gamma"] / jnp.sqrt(params["running_var"] + eps)
        shift = params["beta"] - params["running_mean"] * scale
    else:
        scale = jnp.ones((cout,), jnp.float32)
        shift = params["bias"].astype(jnp.float32)
    w_fold = weight * scale[:, None, None, None]
    # (G, Cout_g, KH*KW*Cin_g): K-dim order = (tap-major, channel-minor) to
    # match the in-kernel concatenation order.  bf16 for the MXU (tiny tensor).
    w_k = jnp.transpose(
        w_fold.reshape(groups, cout_g, cin_g, kh, kw),
        (0, 1, 3, 4, 2)).reshape(groups, cout_g, k_dim).astype(jnp.bfloat16)
    shift_k = shift.reshape(groups, cout_g, 1).astype(jnp.float32)

    # Spatially pad the NCHW input (bf16).  Extra zero rows at the bottom keep
    # every tap's flat window [i*W_pad + j, ... + stride*(M-1) + 1) in bounds
    # after flattening (H_pad, W_pad) -> L.
    needed = stride * (m - 1) + (kh - 1) * w_pad + (kw - 1) + 1
    extra_rows = max(0, -(-(needed - h_pad * w_pad) // w_pad))
    x_p = jnp.pad(x.astype(jnp.bfloat16),
                  ((0, 0), (0, 0),
                   (padding, padding + extra_rows),
                   (padding, padding)))
    l_flat = (h_pad + extra_rows) * w_pad
    x_k = x_p.reshape(n, groups, cin_g, l_flat)   # contiguous reshape (free)

    # --- VMEM budgeting -----------------------------------------------------
    in_img_bytes = cin_g * l_flat * 2             # bf16 input block / image
    out_img_bytes = cout_g * m * 4                # f32 output block / image
    w_bytes = cout_g * k_dim * 2
    nb = _pick_batch_tile(n, groups, in_img_bytes, out_img_bytes, w_bytes,
                          budget=24 << 20)        # conservative (v7x 64MiB VMEM)
    shift_tile_bytes = max(cout_g, 8) * 128 * 4
    per_step_bytes = (2 * (nb * (in_img_bytes + out_img_bytes)
                           + w_bytes + shift_tile_bytes)
                      + k_dim * m * 2 + cout_g * m * 4)   # + rhs/acc temporaries
    vmem_limit = int(min(64 << 20, max(2 * per_step_bytes, 32 << 20)))

    taps = tuple((i, j) for i in range(kh) for j in range(kw))
    kernel = functools.partial(_conv_bn_act_kernel, taps=taps, w_pad=w_pad,
                               m=m, stride=stride, has_act=has_act, nb=nb)

    flops = 2 * n * cout * cin_g * kh * kw * oh * ow
    bytes_accessed = (x_k.size * 2 + w_k.size * 2 + shift_k.size * 4
                      + n * groups * cout_g * m * 4)

    out = pl.pallas_call(
        kernel,
        out_shape=jax.ShapeDtypeStruct((n, groups, cout_g, m), jnp.float32),
        grid_spec=pltpu.PrefetchScalarGridSpec(
            num_scalar_prefetch=0,
            # groups outer, batch inner: weight/shift blocks (index only on g)
            # stay VMEM-resident across the whole batch axis.
            grid=(groups, n // nb),
            in_specs=[
                pl.BlockSpec((nb, 1, cin_g, l_flat),
                             lambda g, b: (b, g, 0, 0)),
                pl.BlockSpec((1, cout_g, k_dim),
                             lambda g, b: (g, 0, 0)),
                pl.BlockSpec((1, cout_g, 1),
                             lambda g, b: (g, 0, 0)),
            ],
            out_specs=pl.BlockSpec((nb, 1, cout_g, m),
                                   lambda g, b: (b, g, 0, 0)),
        ),
        compiler_params=pltpu.CompilerParams(
            dimension_semantics=("parallel", "parallel"),
            vmem_limit_bytes=vmem_limit),
        cost_estimate=pl.CostEstimate(flops=int(flops), transcendentals=0,
                                      bytes_accessed=int(bytes_accessed)),
    )(x_k, w_k, shift_k)

    # (N, G, Cout_g, OH, W_pad): NCHW channel order is already correct for any
    # groups count (no transpose pass).
    out = out.reshape(n, groups, cout_g, oh, w_pad)
    if keep_halo:
        # Halo layout for a fused downstream consumer that skips its re-pad.
        return out
    return out[..., :ow].reshape(n, cout, oh, ow)


# ---------------------------------------------------------------------------
# Reference (plain JAX) for verification
# ---------------------------------------------------------------------------
def _reference(x, params, *, stride, padding, groups, has_bn, has_act, eps=1e-5):
    y = jax.lax.conv_general_dilated(
        x, params["weight"],
        window_strides=(stride, stride),
        padding=((padding, padding), (padding, padding)),
        dimension_numbers=("NCHW", "OIHW", "NCHW"),
        feature_group_count=groups)
    if has_bn:
        scale = params["gamma"] / jnp.sqrt(params["running_var"] + eps)
        shift = params["beta"] - params["running_mean"] * scale
        y = y * scale[None, :, None, None] + shift[None, :, None, None]
    else:
        y = y + params["bias"][None, :, None, None]
    if has_act:
        y = jnp.maximum(y, 0.0)
    return y


if __name__ == "__main__":
    # Module config: ConvBnActBlock(inplanes=4, planes=8, kernel_size=3,
    #                               stride=1, padding=1, groups=1,
    #                               has_bn=True, has_act=True)
    inplanes, planes, ksize, stride, padding, groups = 4, 8, 3, 1, 1, 1
    has_bn, has_act = True, True

    key = jax.random.PRNGKey(0)
    kx, kwt, kg, kb, km, kv = jax.random.split(key, 6)

    x = jax.random.normal(kx, (2, inplanes, 16, 16), jnp.float32)

    params = {
        "weight": jax.random.normal(
            kwt, (planes, inplanes // groups, ksize, ksize), jnp.float32) * 0.1,
        "gamma": 1.0 + 0.1 * jax.random.normal(kg, (planes,), jnp.float32),
        "beta": 0.1 * jax.random.normal(kb, (planes,), jnp.float32),
        "running_mean": 0.1 * jax.random.normal(km, (planes,), jnp.float32),
        "running_var": jnp.abs(
            jax.random.normal(kv, (planes,), jnp.float32)) + 0.5,
        "bias": jnp.zeros((planes,), jnp.float32),  # unused when has_bn=True
    }

    fwd = jax.jit(functools.partial(conv_bn_act_block, stride=stride,
                                    padding=padding, groups=groups,
                                    has_bn=has_bn, has_act=has_act))
    out = jax.block_until_ready(fwd(x, params))

    ref = _reference(x, params, stride=stride, padding=padding, groups=groups,
                     has_bn=has_bn, has_act=has_act)
    assert out.shape == (2, planes, 16, 16)
    # bf16 MXU inputs with f32 accumulation: tolerance loosened accordingly.
    assert jnp.max(jnp.abs(out - ref)) < 5e-2, "mismatch vs reference"

    print("KERNEL_OK")
</pallas_src>

<mosaic_0001>
module attributes {stable_mosaic.version = 11 : i64} {
  func.func @_conv_bn_act_kernel(%arg0: i32, %arg1: i32, %arg2: memref<1x1x4x342xbf16, #tpu.memory_space<vmem>>, %arg3: memref<1x8x36xbf16, #tpu.memory_space<vmem>>, %arg4: memref<1x8x1xf32, #tpu.memory_space<vmem>>, %arg5: memref<1x1x8x288xf32, #tpu.memory_space<vmem>>) attributes {dimension_semantics = [#tpu.dimension_semantics<parallel>, #tpu.dimension_semantics<parallel>], iteration_bounds = array<i64: 1, 2>, scalar_prefetch = 0 : i64, scratch_operands = 0 : i64, tpu.core_type = #tpu.core_type<tc>, window_params = [{transform_indices = @transform_0, window_bounds = array<i64: 1, 1, 4, 342>}, {transform_indices = @transform_1, window_bounds = array<i64: 1, 8, 36>}, {transform_indices = @transform_2, window_bounds = array<i64: 1, 8, 1>}, {transform_indices = @transform_3, window_bounds = array<i64: 1, 1, 8, 288>}]} {
    %c0 = arith.constant 0 : index
    %c0_0 = arith.constant 0 : index
    %c0_1 = arith.constant 0 : index
    %0 = vector.load %arg3[%c0, %c0_0, %c0_1] : memref<1x8x36xbf16, #tpu.memory_space<vmem>>, vector<1x8x36xbf16>
    %1 = vector.shape_cast %0 : vector<1x8x36xbf16> to vector<8x36xbf16>
    %c0_2 = arith.constant 0 : index
    %c0_3 = arith.constant 0 : index
    %c0_4 = arith.constant 0 : index
    %2 = vector.load %arg4[%c0_2, %c0_3, %c0_4] : memref<1x8x1xf32, #tpu.memory_space<vmem>>, vector<1x8x1xf32>
    %3 = vector.shape_cast %2 : vector<1x8x1xf32> to vector<8x1xf32>
    %c0_5 = arith.constant 0 : index
    %c0_6 = arith.constant 0 : index
    %c0_7 = arith.constant 0 : index
    %c0_8 = arith.constant 0 : index
    %4 = vector.load %arg2[%c0_5, %c0_6, %c0_7, %c0_8] : memref<1x1x4x342xbf16, #tpu.memory_space<vmem>>, vector<1x1x4x288xbf16>
    %5 = vector.shape_cast %4 : vector<1x1x4x288xbf16> to vector<4x288xbf16>
    %c0_9 = arith.constant 0 : index
    %c0_10 = arith.constant 0 : index
    %c0_11 = arith.constant 0 : index
    %c1 = arith.constant 1 : index
    %6 = vector.load %arg2[%c0_9, %c0_10, %c0_11, %c1] : memref<1x1x4x342xbf16, #tpu.memory_space<vmem>>, vector<1x1x4x288xbf16>
    %7 = vector.shape_cast %6 : vector<1x1x4x288xbf16> to vector<4x288xbf16>
    %c0_12 = arith.constant 0 : index
    %c0_13 = arith.constant 0 : index
    %c0_14 = arith.constant 0 : index
    %c2 = arith.constant 2 : index
    %8 = vector.load %arg2[%c0_12, %c0_13, %c0_14, %c2] : memref<1x1x4x342xbf16, #tpu.memory_space<vmem>>, vector<1x1x4x288xbf16>
    %9 = vector.shape_cast %8 : vector<1x1x4x288xbf16> to vector<4x288xbf16>
    %c0_15 = arith.constant 0 : index
    %c0_16 = arith.constant 0 : index
    %c0_17 = arith.constant 0 : index
    %c18 = arith.constant 18 : index
    %10 = vector.load %arg2[%c0_15, %c0_16, %c0_17, %c18] : memref<1x1x4x342xbf16, #tpu.memory_space<vmem>>, vector<1x1x4x288xbf16>
    %11 = vector.shape_cast %10 : vector<1x1x4x288xbf16> to vector<4x288xbf16>
    %c0_18 = arith.constant 0 : index
    %c0_19 = arith.constant 0 : index
    %c0_20 = arith.constant 0 : index
    %c19 = arith.constant 19 : index
    %12 = vector.load %arg2[%c0_18, %c0_19, %c0_20, %c19] : memref<1x1x4x342xbf16, #tpu.memory_space<vmem>>, vector<1x1x4x288xbf16>
    %13 = vector.shape_cast %12 : vector<1x1x4x288xbf16> to vector<4x288xbf16>
    %c0_21 = arith.constant 0 : index
    %c0_22 = arith.constant 0 : index
    %c0_23 = arith.constant 0 : index
    %c20 = arith.constant 20 : index
    %14 = vector.load %arg2[%c0_21, %c0_22, %c0_23, %c20] : memref<1x1x4x342xbf16, #tpu.memory_space<vmem>>, vector<1x1x4x288xbf16>
    %15 = vector.shape_cast %14 : vector<1x1x4x288xbf16> to vector<4x288xbf16>
    %c0_24 = arith.constant 0 : index
    %c0_25 = arith.constant 0 : index
    %c0_26 = arith.constant 0 : index
    %c36 = arith.constant 36 : index
    %16 = vector.load %arg2[%c0_24, %c0_25, %c0_26, %c36] : memref<1x1x4x342xbf16, #tpu.memory_space<vmem>>, vector<1x1x4x288xbf16>
    %17 = vector.shape_cast %16 : vector<1x1x4x288xbf16> to vector<4x288xbf16>
    %c0_27 = arith.constant 0 : index
    %c0_28 = arith.constant 0 : index
    %c0_29 = arith.constant 0 : index
    %c37 = arith.constant 37 : index
    %18 = vector.load %arg2[%c0_27, %c0_28, %c0_29, %c37] : memref<1x1x4x342xbf16, #tpu.memory_space<vmem>>, vector<1x1x4x288xbf16>
    %19 = vector.shape_cast %18 : vector<1x1x4x288xbf16> to vector<4x288xbf16>
    %c0_30 = arith.constant 0 : index
    %c0_31 = arith.constant 0 : index
    %c0_32 = arith.constant 0 : index
    %c38 = arith.constant 38 : index
    %20 = vector.load %arg2[%c0_30, %c0_31, %c0_32, %c38] : memref<1x1x4x342xbf16, #tpu.memory_space<vmem>>, vector<1x1x4x288xbf16>
    %21 = vector.shape_cast %20 : vector<1x1x4x288xbf16> to vector<4x288xbf16>
    %22 = tpu.concatenate %5, %7, %9, %11, %13, %15, %17, %19, %21 in 0 : vector<4x288xbf16>, vector<4x288xbf16>, vector<4x288xbf16>, vector<4x288xbf16>, vector<4x288xbf16>, vector<4x288xbf16>, vector<4x288xbf16>, vector<4x288xbf16>, vector<4x288xbf16> -> vector<36x288xbf16>
    %cst = arith.constant dense<0.000000e+00> : vector<8x288xf32>
    %23 = tpu.matmul %1, %22, %cst {dimension_numbers = #tpu.dot_dimension_numbers<[1], [0], [0], [1], [0, 0, 1, 1], [], []>} : vector<8x36xbf16>, vector<36x288xbf16>, vector<8x288xf32> -> vector<8x288xf32>
    %24 = vector.broadcast %3 : vector<8x1xf32> to vector<8x288xf32>
    %25 = arith.addf %23, %24 : vector<8x288xf32>
    %cst_33 = arith.constant 0.000000e+00 : f32
    %26 = vector.broadcast %cst_33 : f32 to vector<8x288xf32>
    %27 = arith.maximumf %25, %26 : vector<8x288xf32>
    %c0_34 = arith.constant 0 : index
    %c0_35 = arith.constant 0 : index
    %c0_36 = arith.constant 0 : index
    %c0_37 = arith.constant 0 : index
    %28 = vector.load %arg5[%c0_34, %c0_35, %c0_36, %c0_37] : memref<1x1x8x288xf32, #tpu.memory_space<vmem>>, vector<1x1x8x288xf32>
    %29 = vector.shape_cast %28 : vector<1x1x8x288xf32> to vector<8x288xf32>
    %30 = vector.shape_cast %27 : vector<8x288xf32> to vector<1x1x8x288xf32>
    tpu.vector_store %arg5[%c0_34, %c0_35, %c0_36, %c0_37], %30 {strides = array<i32>} : memref<1x1x8x288xf32, #tpu.memory_space<vmem>>, vector<1x1x8x288xf32>,
    return
  }
  func.func @transform_0(%arg0: i32, %arg1: i32) -> (i32, i32, i32, i32) {
    %c0_i32 = arith.constant 0 : i32
    %c0_i32_0 = arith.constant 0 : i32
    %c0_i32_1 = arith.constant 0 : i32
    return %arg1, %arg0, %c0_i32, %c0_i32_0 : i32, i32, i32, i32
  }
  func.func @transform_1(%arg0: i32, %arg1: i32) -> (i32, i32, i32) {
    %c0_i32 = arith.constant 0 : i32
    %c0_i32_0 = arith.constant 0 : i32
    %c0_i32_1 = arith.constant 0 : i32
    return %arg0, %c0_i32, %c0_i32_0 : i32, i32, i32
  }
  func.func @transform_2(%arg0: i32, %arg1: i32) -> (i32, i32, i32) {
    %c0_i32 = arith.constant 0 : i32
    %c0_i32_0 = arith.constant 0 : i32
    %c0_i32_1 = arith.constant 0 : i32
    return %arg0, %c0_i32, %c0_i32_0 : i32, i32, i32
  }
  func.func @transform_3(%arg0: i32, %arg1: i32) -> (i32, i32, i32, i32) {
    %c0_i32 = arith.constant 0 : i32
    %c0_i32_0 = arith.constant 0 : i32
    %c0_i32_1 = arith.constant 0 : i32
    return %arg1, %arg0, %c0_i32, %c0_i32_0 : i32, i32, i32, i32
  }
}

</mosaic_0001>

<llo_original>
// kernel: conv_bn_act_block.1
$region0: #{conv_bn_act_block.1}
  #allocation0 [shape = 'u32[]', space=smem, size = 0x4, offset = 0x4, fixed_abs, tag = 'smem constant byte address 0x4 - core index']
  #allocation1 [shape = 'u32[144,128]{1,0:T(1,128)}', space=vmem, size = 0x12000, scoped, tag = 'internal scratch']
  %s0 = inlined_call_operand.vmem [shape: bf16[2,1,4,342], index: 0, kind: input, shape index: {}]
  %s1 = inlined_call_operand.vmem [shape: bf16[1,8,36], index: 1, kind: input, shape index: {}]
  %s2 = inlined_call_operand.vmem [shape: f32[1,8,1], index: 2, kind: input, shape index: {}]
  %s3 = inlined_call_operand.vmem [shape: f32[2,1,8,288], index: 3, kind: output, shape index: {}]
  %s4 = sld [smem:[#allocation0]]
  $region45: #{conv_bn_act_block.1} parent=0
    _
  %s6 = ssub.s32 1, %s4
  %s7 = scalar_select 0, %s6, %s4
  loop: start=0, step=1, limit=4
  $region2: #{conv_bn_act_block.1} parent=0 // loop_pre_header
    _
  $region3: #{conv_bn_act_block.1} parent=0 // loop_header
    %s9 = sphi 0, %s13
    %p10 = scmp.ge.s32.totalorder %s9, 4
    %s16 = sphi 0, %s28
    %s17 = sphi 0, %s24
    %s18 = sphi 0, %s16
    %s19 = sphi 0, %s17
    %s20 = sphi 0, %s18
    %s21 = sphi 0, %s19
    %s33 = sphi 0, %s35
    %s36 = sphi 0, %s33
    %s37 = sphi 0, %s36
    %s53 = sphi 0, %s37
    %s59 = sphi 0, %s61
    %s62 = sphi 0, %s59
    %s63 = sphi 0, %s62
    %s79 = sphi 0, %s63
    %s85 = sphi 0, %s87
    %s88 = sphi 0, %s85
    %s89 = sphi 0, %s88
    %s105 = sphi 0, %s89
    %s113 = sphi 0, %s115
    %s116 = sphi 0, %s113
    %s117 = sphi 0, %s116
    %s133 = sphi 0, %s117
  $region4: #{conv_bn_act_block.1} parent=0 // loop_header_branch
    %12 = sbr.rel (%p10) target = $region8
  $region5: #{conv_bn_act_block.1} parent=0 // loop_body
    %s14 = ssub.s32 %s9, 1
    %s15 = ssub.s32 %s9, 2
    %s22 = sadd.s32 1, %s17
    %p23 = scmp.ge.s32.totalorder %s22, 2
    %s24 = scalar_select %p23, 0, %s22
    %s25 = sadd.s32 1, %s16
    %s26 = scalar_select %p23, %s25, %s16
    %p27 = scmp.ge.s32.totalorder %s26, 1
    %s28 = scalar_select %p27, 0, %s26
    %s29 = ssub.s32 %s17, %s24
    %s30 = ssub.s32 %s16, %s28
    %s31 = sor.u32 %s29, %s30
    %p32 = scmp.eq.s32.totalorder %s31, 0
    %s34 = sadd.s32 %s33, 1
    %s35 = scalar_select %p32, %s33, %s34
    %p38 = pneg %p32
    %p39 = scmp.eq.s32.totalorder %s9, 1
    %p40 = por %p38, %p39
    %p41 = scmp.ne.s32.totalorder %s33, %s36
    %p42 = scmp.eq.s32.totalorder %s9, 0
    %p43 = por %p41, %p42
    %p44 = scmp.ne.s32.totalorder %s33, %s36
    %p45 = scmp.eq.s32.totalorder %s14, 1
    %p46 = por %p44, %p45
    %p47 = scmp.ne.s32.totalorder %s36, %s37
    %p48 = scmp.eq.s32.totalorder %s14, 0
    %p49 = por %p47, %p48
    %p50 = scmp.ne.s32.totalorder %s36, %s37
    %p51 = scmp.eq.s32.totalorder %s15, 1
    %p52 = por %p50, %p51
    %p54 = scmp.ne.s32.totalorder %s37, %s53
    %p55 = scmp.eq.s32.totalorder %s15, 0
    %p56 = por %p54, %p55
    %s57 = ssub.s32 %s16, %s28
    %p58 = scmp.eq.s32.totalorder %s57, 0
    %s60 = sadd.s32 %s59, 1
    %s61 = scalar_select %p58, %s59, %s60
    %p64 = pneg %p58
    %p65 = scmp.eq.s32.totalorder %s9, 1
    %p66 = por %p64, %p65
    %p67 = scmp.ne.s32.totalorder %s59, %s62
    %p68 = scmp.eq.s32.totalorder %s9, 0
    %p69 = por %p67, %p68
    %p70 = scmp.ne.s32.totalorder %s59, %s62
    %p71 = scmp.eq.s32.totalorder %s14, 1
    %p72 = por %p70, %p71
    %p73 = scmp.ne.s32.totalorder %s62, %s63
    %p74 = scmp.eq.s32.totalorder %s14, 0
    %p75 = por %p73, %p74
    %p76 = scmp.ne.s32.totalorder %s62, %s63
    %p77 = scmp.eq.s32.totalorder %s15, 1
    %p78 = por %p76, %p77
    %p80 = scmp.ne.s32.totalorder %s63, %s79
    %p81 = scmp.eq.s32.totalorder %s15, 0
    %p82 = por %p80, %p81
    %s83 = ssub.s32 %s16, %s28
    %p84 = scmp.eq.s32.totalorder %s83, 0
    %s86 = sadd.s32 %s85, 1
    %s87 = scalar_select %p84, %s85, %s86
    %p90 = pneg %p84
    %p91 = scmp.eq.s32.totalorder %s9, 1
    %p92 = por %p90, %p91
    %p93 = scmp.ne.s32.totalorder %s85, %s88
    %p94 = scmp.eq.s32.totalorder %s9, 0
    %p95 = por %p93, %p94
    %p96 = scmp.ne.s32.totalorder %s85, %s88
    %p97 = scmp.eq.s32.totalorder %s14, 1
    %p98 = por %p96, %p97
    %p99 = scmp.ne.s32.totalorder %s88, %s89
    %p100 = scmp.eq.s32.totalorder %s14, 0
    %p101 = por %p99, %p100
    %p102 = scmp.ne.s32.totalorder %s88, %s89
    %p103 = scmp.eq.s32.totalorder %s15, 1
    %p104 = por %p102, %p103
    %p106 = scmp.ne.s32.totalorder %s89, %s105
    %p107 = scmp.eq.s32.totalorder %s15, 0
    %p108 = por %p106, %p107
    %s109 = ssub.s32 %s17, %s24
    %s110 = ssub.s32 %s16, %s28
    %s111 = sor.u32 %s109, %s110
    %p112 = scmp.eq.s32.totalorder %s111, 0
    %s114 = sadd.s32 %s113, 1
    %s115 = scalar_select %p112, %s113, %s114
    %p118 = pneg %p112
    %p119 = scmp.eq.s32.totalorder %s9, 1
    %p120 = por %p118, %p119
    %p121 = scmp.ne.s32.totalorder %s113, %s116
    %p122 = scmp.eq.s32.totalorder %s9, 0
    %p123 = por %p121, %p122
    %p124 = scmp.ne.s32.totalorder %s113, %s116
    %p125 = scmp.eq.s32.totalorder %s14, 1
    %p126 = por %p124, %p125
    %p127 = scmp.ne.s32.totalorder %s116, %s117
    %p128 = scmp.eq.s32.totalorder %s14, 0
    %p129 = por %p127, %p128
    %p130 = scmp.ne.s32.totalorder %s116, %s117
    %p131 = scmp.eq.s32.totalorder %s15, 1
    %p132 = por %p130, %p131
    %p134 = scmp.ne.s32.totalorder %s117, %s133
    %p135 = scmp.eq.s32.totalorder %s15, 0
    %p136 = por %p134, %p135
    %p137 = scmp.le.s32.totalorder 1, %s9
    %p138 = scmp.lt.s32.totalorder %s9, 3
    %p139 = pnand %p137, %p138
    %p140 = pneg %p139
    // Predicated region
    $region9: #{conv_bn_act_block.1} parent=5 // pred_check
      _
    $region10: #{conv_bn_act_block.1} parent=5 // pred_check_branch
      %142 = sbr.rel (%p139) target = $region12
    $region11: #{conv_bn_act_block.1} parent=5 // pred_region
      %s143 = ssub.s32 %s9, 1
      // Predicated region
      $region13: #{conv_bn_act_block.1} parent=11 // pred_check
        %p144 = pneg %p75
      $region14: #{conv_bn_act_block.1} parent=11 // pred_check_branch
        %146 = sbr.rel (%p144) target = $region16
      $region15: #{conv_bn_act_block.1} parent=11 // pred_region
        %p147 = scmp.lt.s32.totalorder %s18, 0
        %s148 = scalar_select %p147, %s18, 0
        %s149 = smul.addr %s148, 4
        %s150 = scalar_lea.vmem %s1, %s149
      $region16: #{conv_bn_act_block.1} parent=11 // pred_fallthru
        _
      // Predicated region
      $region17: #{conv_bn_act_block.1} parent=11 // pred_check
        %p151 = pneg %p101
      $region18: #{conv_bn_act_block.1} parent=11 // pred_check_branch
        %153 = sbr.rel (%p151) target = $region20
      $region19: #{conv_bn_act_block.1} parent=11 // pred_region
        %p154 = scmp.lt.s32.totalorder %s18, 0
        %s155 = scalar_select %p154, %s18, 0
        %s156 = smul.addr %s155, 8
        %s157 = scalar_lea.vmem %s2, %s156
      $region20: #{conv_bn_act_block.1} parent=11 // pred_fallthru
        _
    $region12: #{conv_bn_act_block.1} parent=5 // pred_fallthru
      _
    %p158 = scmp.lt.s32.totalorder %s9, 2
    // Predicated region
    $region21: #{conv_bn_act_block.1} parent=5 // pred_check
      %p159 = pneg %p158
    $region22: #{conv_bn_act_block.1} parent=5 // pred_check_branch
      %161 = sbr.rel (%p159) target = $region24
    $region23: #{conv_bn_act_block.1} parent=5 // pred_region
      // Predicated region
      $region25: #{conv_bn_act_block.1} parent=23 // pred_check
        %p162 = pneg %p43
      $region26: #{conv_bn_act_block.1} parent=23 // pred_check_branch
        %164 = sbr.rel (%p162) target = $region28
      $region27: #{conv_bn_act_block.1} parent=23 // pred_region
        %p165 = scmp.lt.s32.totalorder %s17, 1
        %s166 = scalar_select %p165, %s17, 1
        %p167 = scmp.lt.s32.totalorder %s16, 0
        %s168 = scalar_select %p167, %s16, 0
        %s169 = smul.addr %s168, 3
        %s170 = smul.addr %s166, 3
        %s171 = sadd.s32 %s169, %s170
        %s172 = smul.addr %s171, 2
        %s173 = scalar_lea.vmem %s0, %s172
      $region28: #{conv_bn_act_block.1} parent=23 // pred_fallthru
        _
    $region24: #{conv_bn_act_block.1} parent=5 // pred_fallthru
      _
    %p174 = scmp.le.s32.totalorder 1, %s9
    %p175 = scmp.lt.s32.totalorder %s9, 3
    %p176 = pnand %p174, %p175
    %p177 = pneg %p176
    // Predicated region
    $region29: #{conv_bn_act_block.1} parent=5 // pred_check
      _
    $region30: #{conv_bn_act_block.1} parent=5 // pred_check_branch
      %179 = sbr.rel (%p176) target = $region32
    $region31: #{conv_bn_act_block.1} parent=5 // pred_region
      %s180 = ssub.s32 %s9, 1
      %p181 = scmp.lt.s32.totalorder %s19, 1
      %s182 = scalar_select %p181, %s19, 1
      %p183 = scmp.lt.s32.totalorder %s18, 0
      %s184 = scalar_select %p183, %s18, 0
      %s185 = smul.addr %s184, 3
      %s186 = smul.addr %s182, 3
      %s187 = sadd.s32 %s185, %s186
      %s188 = smul.addr %s187, 2
      %s189 = scalar_lea.vmem %s0, %s188
      %p190 = pneg %p49
      %p191 = pneg %p46
      %p192 = scmp.lt.s32.totalorder %s18, 0
      %s193 = scalar_select %p192, %s18, 0
      %s194 = smul.addr %s193, 4
      %s195 = scalar_lea.vmem %s1, %s194
      %p196 = pneg %p75
      %p197 = pneg %p72
      %p198 = scmp.lt.s32.totalorder %s18, 0
      %s199 = scalar_select %p198, %s18, 0
      %s200 = smul.addr %s199, 8
      %s201 = scalar_lea.vmem %s2, %s200
      %p202 = pneg %p101
      %p203 = pneg %p98
      %p204 = pneg %p129
      %p205 = pneg %p126
      %p206 = scmp.lt.s32.totalorder %s19, 1
      %s207 = scalar_select %p206, %s19, 1
      %p208 = scmp.lt.s32.totalorder %s18, 0
      %s209 = scalar_select %p208, %s18, 0
      %s210 = smul.addr %s209, 3
      %s211 = smul.addr %s207, 3
      %s212 = sadd.s32 %s210, %s211
      %s213 = smul.addr %s212, 8
      %s214 = scalar_lea.vmem %s3, %s213
      %p215 = scmp.lt.s32.totalorder %s19, 1
      %s216 = scalar_select %p215, %s19, 1
      %p217 = scmp.lt.s32.totalorder %s18, 0
      %s218 = scalar_select %p217, %s18, 0
      %s219 = smul.addr %s218, 3
      %s220 = smul.addr %s216, 3
      %s221 = sadd.s32 %s219, %s220
      %s222 = smul.addr %s221, 2
      %s223 = scalar_lea.vmem %s0, %s222
      %p224 = scmp.lt.s32.totalorder %s18, 0
      %s225 = scalar_select %p224, %s18, 0
      %s226 = smul.addr %s225, 4
      %s227 = scalar_lea.vmem %s1, %s226
      %p228 = scmp.lt.s32.totalorder %s18, 0
      %s229 = scalar_select %p228, %s18, 0
      %s230 = smul.addr %s229, 8
      %s231 = scalar_lea.vmem %s2, %s230
      %p232 = scmp.lt.s32.totalorder %s19, 1
      %s233 = scalar_select %p232, %s19, 1
      %p234 = scmp.lt.s32.totalorder %s18, 0
      %s235 = scalar_select %p234, %s18, 0
      %s236 = smul.addr %s235, 3
      %s237 = smul.addr %s233, 3
      %s238 = sadd.s32 %s236, %s237
      %s239 = smul.addr %s238, 8
      %s240 = scalar_lea.vmem %s3, %s239
      %v242 = vld [vmem:[%s227] sm:$0xf]
      %v243 = vld [vmem:[%s231] sm:$0xff]
      %v244 = vld [vmem:[%s223] sm:$0x3f]
      %v246 = vcombine.high %v244, %v244
      %v248 = vunpack.c.l.s4 1983009808
      %v249 = vunpack.c.0.s8 %v248
      %v250 = vlaneseq
      %v251 = vshrl.u32 %v250, 7
      %v252 = vsub.s32 %v249, %v251
      %v253 = vrot.slane %v244, %v252
      %v255 = vunpack.c.l.s4 1983009808
      %v256 = vunpack.c.0.s8 %v255
      %v257 = vlaneseq
      %v258 = vshrl.u32 %v257, 7
      %v259 = vsub.s32 %v256, %v258
      %v260 = vrot.slane %v246, %v259
      %v261 = vcombine.high %v253, %v253
      %v262 = vcombine.low %v244, %v244
      %v264 = vunpack.c.l.s4 1983009808
      %v265 = vunpack.c.0.s8 %v264
      %v266 = vlaneseq
      %v267 = vshrl.u32 %v266, 7
      %v268 = vsub.s32 %v265, %v267
      %v269 = vrot.slane %v262, %v268
      %v270 = vcombine.high %v269, %v269
      %271 = vrot.lane.b32.xlu0 %v269, 127
      %v272 = vpop.permute.xlu0 %271
      %273 = vrot.lane.b32.xlu0 %v270, 127
      %v274 = vpop.permute.xlu0 %273
      %275 = vrot.lane.b32.xlu0 %v253, 127
      %v276 = vpop.permute.xlu0 %275
      %vm277 = vcmask 1039360
      %v278 = vsel %vm277, %v272, %v274
      %v279 = vsel %vm277, %v274, %v276
      %v280 = vcombine.low %v253, %v253
      %v281 = vcombine.low %v260, %v260
      %282 = vrot.lane.b32.xlu0 %v280, 126
      %v283 = vpop.permute.xlu0 %282
      %284 = vrot.lane.b32.xlu0 %v253, 126
      %v285 = vpop.permute.xlu0 %284
      %286 = vrot.lane.b32.xlu0 %v281, 126
      %v287 = vpop.permute.xlu0 %286
      %vm288 = vcmask 1031168
      %v289 = vsel %vm288, %v283, %v285
      %v290 = vsel %vm288, %v285, %v287
      %v291 = vcombine.low %v269, %v269
      %292 = vrot.lane.b32.xlu0 %v291, 110
      %v293 = vpop.permute.xlu0 %292
      %294 = vrot.lane.b32.xlu0 %v269, 110
      %v295 = vpop.permute.xlu0 %294
      %296 = vrot.lane.b32.xlu0 %v280, 110
      %v297 = vpop.permute.xlu0 %296
      %vm298 = vcmask 900096
      %v299 = vsel %vm298, %v293, %v295
      %v300 = vsel %vm298, %v295, %v297
      %301 = vrot.lane.b32.xlu0 %v253, 109
      %v302 = vpop.permute.xlu0 %301
      %303 = vrot.lane.b32.xlu0 %v261, 109
      %v304 = vpop.permute.xlu0 %303
      %305 = vrot.lane.b32.xlu0 %v260, 109
      %v306 = vpop.permute.xlu0 %305
      %vm307 = vcmask 891904
      %v308 = vsel %vm307, %v302, %v304
      %v309 = vsel %vm307, %v304, %v306
      %310 = vrot.lane.b32.xlu0 %v269, 108
      %v311 = vpop.permute.xlu0 %310
      %312 = vrot.lane.b32.xlu0 %v270, 108
      %v313 = vpop.permute.xlu0 %312
      %314 = vrot.lane.b32.xlu0 %v253, 108
      %v315 = vpop.permute.xlu0 %314
      %vm316 = vcmask 883712
      %v317 = vsel %vm316, %v311, %v313
      %v318 = vsel %vm316, %v313, %v315
      %319 = vrot.lane.b32.xlu0 %v280, 92
      %v320 = vpop.permute.xlu0 %319
      %321 = vrot.lane.b32.xlu0 %v253, 92
      %v322 = vpop.permute.xlu0 %321
      %323 = vrot.lane.b32.xlu0 %v281, 92
      %v324 = vpop.permute.xlu0 %323
      %vm325 = vcmask 752640
      %v326 = vsel %vm325, %v320, %v322
      %v327 = vsel %vm325, %v322, %v324
      %328 = vrot.lane.b32.xlu0 %v291, 91
      %v329 = vpop.permute.xlu0 %328
      %330 = vrot.lane.b32.xlu0 %v269, 91
      %v331 = vpop.permute.xlu0 %330
      %332 = vrot.lane.b32.xlu0 %v280, 91
      %v333 = vpop.permute.xlu0 %332
      %vm334 = vcmask 744448
      %v335 = vsel %vm334, %v329, %v331
      %v336 = vsel %vm334, %v331, %v333
      %337 = vrot.lane.b32.xlu0 %v253, 90
      %v338 = vpop.permute.xlu0 %337
      %339 = vrot.lane.b32.xlu0 %v261, 90
      %v340 = vpop.permute.xlu0 %339
      %341 = vrot.lane.b32.xlu0 %v260, 90
      %v342 = vpop.permute.xlu0 %341
      %vm343 = vcmask 736256
      %v344 = vsel %vm343, %v338, %v340
      %v345 = vsel %vm343, %v340, %v342
      %vm346 = vcmask 1041408
      %v349 = vsel %vm346, %v253, %v278
      %v352 = vsel %vm346, %v261, %v279
      %v355 = vsel %vm346, %v260, %v276
      %vm356 = vcmask 1043456
      %v358 = vsel %vm356, %v349, %v289
      %v360 = vsel %vm356, %v352, %v290
      %v362 = vsel %vm356, %v355, %v287
      %vm363 = vcmask 1045504
      %v365 = vsel %vm363, %v358, %v299
      %v368 = vsel %vm363, %v360, %v300
      %v371 = vsel %vm363, %v362, %v297
      %v375 = vsel %vm346, %v308, %v317
      %v378 = vsel %vm346, %v309, %v318
      %v381 = vsel %vm346, %v306, %v315
      %v383 = vsel %vm356, %v375, %v326
      %v385 = vsel %vm356, %v378, %v327
      %v387 = vsel %vm356, %v381, %v324
      %v389 = vsel %vm363, %v383, %v335
      %v392 = vsel %vm363, %v385, %v336
      %v395 = vsel %vm363, %v387, %v333
      %398 = vset.pattern.permute.xlu0 0
      %399 = vperm.xlu0 %398, %v243
      %v400 = vpop.permute.xlu0 %399
      %vm402 = vcmask 293888
      %v404 = vsel %vm402, %v242, 0
      %v407 = vsel %vm346, %v344, 0
      %v410 = vsel %vm346, %v345, 0
      %v413 = vsel %vm346, %v342, 0
      %415 = vmatprep.subr.bf16.mxu0 0
      %416 = vmatpush1.bf16.msra.mxu0 0
      %417 = vmatprep.subr.bf16.mxu0 0
      %418 = vmatpush1.bf16.msra.mxu0 0
      %419 = vmatprep.subr.bf16.mxu0 0
      %420 = vmatpush1.bf16.msra.mxu0 0
      %421 = vmatprep.subr.bf16.mxu0 0
      %422 = vmatpush1.bf16.msra.mxu0 0
      %423 = vmatprep.subr.bf16.mxu0 0
      %424 = vmatpush1.bf16.msra.mxu0 0
      %425 = vmatprep.subr.bf16.mxu0 %v410
      %426 = vmatpush1.bf16.msra.mxu0 %v407
      %427 = vmatprep.subr.bf16.mxu0 %v392
      %428 = vmatpush1.bf16.msra.mxu0 %v389
      %429 = vmatprep.subr.bf16.mxu0 %v368
      %430 = vmatpush1.bf16.msra.mxu0 %v365
      %431 = vmatprep.subr.bf16.mxu0 0
      %432 = vmatpush2.bf16.msra.mxu0 0
      %433 = vmatprep.subr.bf16.mxu0 0
      %434 = vmatpush2.bf16.msra.mxu0 0
      %435 = vmatprep.subr.bf16.mxu0 0
      %436 = vmatpush2.bf16.msra.mxu0 0
      %437 = vmatprep.subr.bf16.mxu0 0
      %438 = vmatpush2.bf16.msra.mxu0 0
      %439 = vmatprep.subr.bf16.mxu0 0
      %440 = vmatpush2.bf16.msra.mxu0 0
      %441 = vmatprep.subr.bf16.mxu0 0
      %442 = vmatpush2.bf16.msra.mxu0 0
      %443 = vmatprep.subr.bf16.mxu0 0
      %444 = vmatpush2.bf16.msra.mxu0 0
      %445 = vmatprep.subr.bf16.mxu0 0
      %446 = vmatpush2.bf16.msra.mxu0 0
      %447 = vmatprep.mubr.bf16.mxu0 0
      %448 = vmatmul.mubr.bf16.gmra.mxu0 %v404
      %v449 = vpop.f32.mrf.mxu0
      %v450 = vadd.f32 %v400, %v449
      %v451 = vpop.f32.mrf.mxu0
      %v452 = vadd.f32 %v400, %v451
      %v453 = vpop.f32.mrf.mxu0
      %v454 = vpop.f32.mrf.mxu0
      %455 = vdwg.mxu0
      %456 = vmatprep.subr.bf16.mxu0 0
      %457 = vmatpush1.bf16.msra.mxu0 0
      %458 = vmatprep.subr.bf16.mxu0 0
      %459 = vmatpush1.bf16.msra.mxu0 0
      %460 = vmatprep.subr.bf16.mxu0 0
      %461 = vmatpush1.bf16.msra.mxu0 0
      %462 = vmatprep.subr.bf16.mxu0 0
      %463 = vmatpush1.bf16.msra.mxu0 0
      %464 = vmatprep.subr.bf16.mxu0 0
      %465 = vmatpush1.bf16.msra.mxu0 0
      %466 = vmatprep.subr.bf16.mxu0 0
      %467 = vmatpush1.bf16.msra.mxu0 %v413
      %468 = vmatprep.subr.bf16.mxu0 0
      %469 = vmatpush1.bf16.msra.mxu0 %v395
      %470 = vmatprep.subr.bf16.mxu0 0
      %471 = vmatpush1.bf16.msra.mxu0 %v371
      %472 = vmatprep.subr.bf16.mxu0 0
      %473 = vmatpush2.bf16.msra.mxu0 0
      %474 = vmatprep.subr.bf16.mxu0 0
      %475 = vmatpush2.bf16.msra.mxu0 0
      %476 = vmatprep.subr.bf16.mxu0 0
      %477 = vmatpush2.bf16.msra.mxu0 0
      %478 = vmatprep.subr.bf16.mxu0 0
      %479 = vmatpush2.bf16.msra.mxu0 0
      %480 = vmatprep.subr.bf16.mxu0 0
      %481 = vmatpush2.bf16.msra.mxu0 0
      %482 = vmatprep.subr.bf16.mxu0 0
      %483 = vmatpush2.bf16.msra.mxu0 0
      %484 = vmatprep.subr.bf16.mxu0 0
      %485 = vmatpush2.bf16.msra.mxu0 0
      %486 = vmatprep.subr.bf16.mxu0 0
      %487 = vmatpush2.bf16.msra.mxu0 0
      %488 = vmatprep.mubr.bf16.mxu0 0
      %489 = vmatmul.mubr.bf16.gmra.mxu0 %v404
      %v490 = vpop.f32.mrf.mxu0
      %v491 = vadd.f32 %v400, %v490
      %v492 = vpop.f32.mrf.mxu0
      %v493 = vpop.f32.mrf.mxu0
      %v494 = vpop.f32.mrf.mxu0
      %495 = vdwg.mxu0
      %v496 = vmax.f32 %v450, 0.0
      %v497 = vmax.f32 %v452, 0.0
      %v498 = vmax.f32 %v491, 0.0
      %499 = vst [vmem:[%s240] sm:$0xff] %v496
      %500 = vst [vmem:[%s240 + $0x8] sm:$0xff] %v497
      %vm501 = vcmask 261120
      %502 = vst.msk [vmem:[%s240 + $0x10] sm:$0xff] %vm501, %v498
      %p503 = scmp.lt.s32.totalorder %s19, 1
      %s504 = scalar_select %p503, %s19, 1
      %p505 = scmp.lt.s32.totalorder %s18, 0
      %s506 = scalar_select %p505, %s18, 0
      %s507 = smul.addr %s506, 3
      %s508 = smul.addr %s504, 3
      %s509 = sadd.s32 %s507, %s508
      %s510 = smul.addr %s509, 8
      %s511 = scalar_lea.vmem %s3, %s510
      // Predicated region
      $region33: #{conv_bn_act_block.1} parent=31 // pred_check
        %p512 = pneg %p126
      $region34: #{conv_bn_act_block.1} parent=31 // pred_check_branch
        %514 = sbr.rel (%p512) target = $region36
      $region35: #{conv_bn_act_block.1} parent=31 // pred_region
        _
      $region36: #{conv_bn_act_block.1} parent=31 // pred_fallthru
        _
    $region32: #{conv_bn_act_block.1} parent=5 // pred_fallthru
      _
    %p515 = scmp.le.s32.totalorder 2, %s9
    // Predicated region
    $region37: #{conv_bn_act_block.1} parent=5 // pred_check
      %p516 = pneg %p515
    $region38: #{conv_bn_act_block.1} parent=5 // pred_check_branch
      %518 = sbr.rel (%p516) target = $region40
    $region39: #{conv_bn_act_block.1} parent=5 // pred_region
      %s519 = ssub.s32 %s9, 2
      // Predicated region
      $region41: #{conv_bn_act_block.1} parent=39 // pred_check
        %p520 = pneg %p132
      $region42: #{conv_bn_act_block.1} parent=39 // pred_check_branch
        %522 = sbr.rel (%p520) target = $region44
      $region43: #{conv_bn_act_block.1} parent=39 // pred_region
        %p523 = scmp.lt.s32.totalorder %s21, 1
        %s524 = scalar_select %p523, %s21, 1
        %p525 = scmp.lt.s32.totalorder %s20, 0
        %s526 = scalar_select %p525, %s20, 0
        %s527 = smul.addr %s526, 3
        %s528 = smul.addr %s524, 3
        %s529 = sadd.s32 %s527, %s528
        %s530 = smul.addr %s529, 8
        %s531 = scalar_lea.vmem %s3, %s530
      $region44: #{conv_bn_act_block.1} parent=39 // pred_fallthru
        _
    $region40: #{conv_bn_act_block.1} parent=5 // pred_fallthru
      _
  $region6: #{conv_bn_act_block.1} parent=0 // loop_footer
    %s13 = sadd.s32 1, %s9
  $region7: #{conv_bn_act_block.1} parent=0 // loop_footer_branch
    %8 = sbr.rel target = $region3
  $region8: #{conv_bn_act_block.1} parent=0 // loop_exit
    _

</llo_original>
